<compile_context>
chip_gen: v6e
topology: v6e:2x2x1
jax: 0.10.0
libtpu: 0.0.40
codegen_flags: <defaults>
</compile_context>

<pallas_src>
import functools

import jax
import jax.numpy as jnp
from jax import lax
from jax.experimental import pallas as pl
from jax.experimental.pallas import tpu as pltpu


def _round_up(x, m):
    return (x + m - 1) // m * m


def _vmem_capacity_bytes():
    """Physical VMEM per TensorCore; conservative default if query fails."""
    try:
        return int(pltpu.get_tpu_info().vmem_capacity_bytes)
    except Exception:  # pragma: no cover - defensive
        return 64 << 20  # v7x per-TC physical (smallest of the three gens)


# ---------------------------------------------------------------------------
# Path 1: small vocabulary -> resident table, one-hot MXU gather.
# ---------------------------------------------------------------------------
def _onehot_gather_kernel(eff_ref, table_ref, *rest, num_rows, fuse):
    """out[tile] = table[eff[tile]] (+ add_to[tile] if fused).

    eff_ref   : (TB, 1) int32  effective labels (CFG drop + clamp already done)
    table_ref : (V, Hp)        VMEM-resident table (single-buffered)
    [t_ref]   : (TB, Hp)       optional fused-add operand (e.g. t_emb)
    out_ref   : (TB, Hp)
    """
    if fuse:
        t_ref, out_ref = rest
    else:
        (out_ref,) = rest

    eff = eff_ref[...]                                        # (TB, 1)
    tb = out_ref.shape[0]
    col = lax.broadcasted_iota(jnp.int32, (tb, num_rows), 1)
    one_hot = (col == eff).astype(table_ref.dtype)            # (TB, V)

    # One-hot x table on the MXU with f32 accumulation -> exact row copy.
    rows = jnp.dot(one_hot, table_ref[...], preferred_element_type=jnp.float32)
    if fuse:
        rows = rows + t_ref[...].astype(jnp.float32)
    out_ref[...] = rows.astype(out_ref.dtype)


# ---------------------------------------------------------------------------
# Path 2: V >> batch -> labels in SMEM (scalar prefetch), table in HBM,
#         per-row DMA gather (issue all, then wait all).
# ---------------------------------------------------------------------------
def _dma_gather_kernel(eff_smem, *rest, tb, fuse):
    """row_buf[r] <- HBM table[eff[base+r]]; out = row_buf (+ add_to).

    eff_smem  : (B_pad,) int32 in SMEM (scalar prefetch)
    [t_ref]   : (TB, Hp) optional fused-add operand
    table_hbm : (V, Hp) in HBM (memory_space=pl.ANY)
    out_ref   : (TB, Hp)
    row_buf   : (TB, Hp) VMEM scratch
    sem       : (1,) DMA semaphore
    """
    if fuse:
        t_ref, table_hbm, out_ref, row_buf, sem = rest
    else:
        table_hbm, out_ref, row_buf, sem = rest

    base = pl.program_id(0) * tb

    def _issue(r, carry):
        row = eff_smem[base + r]
        pltpu.make_async_copy(table_hbm.at[pl.ds(row, 1), :],
                              row_buf.at[pl.ds(r, 1), :],
                              sem.at[0]).start()
        return carry

    lax.fori_loop(0, tb, _issue, 0)

    def _wait(r, carry):
        # All copies have identical (1, Hp) shape, so waits are interchangeable.
        pltpu.make_async_copy(table_hbm.at[pl.ds(0, 1), :],
                              row_buf.at[pl.ds(r, 1), :],
                              sem.at[0]).wait()
        return carry

    lax.fori_loop(0, tb, _wait, 0)

    gathered = row_buf[...]
    if fuse:
        out_ref[...] = (gathered.astype(jnp.float32)
                        + t_ref[...].astype(jnp.float32)).astype(out_ref.dtype)
    else:
        out_ref[...] = gathered.astype(out_ref.dtype)


# ---------------------------------------------------------------------------
# Wrapper
# ---------------------------------------------------------------------------
def label_embed_pallas(labels, drop_ids, table, *, null_index, add_to=None):
    """out[b] = table[eff[b]] (+ add_to[b]), eff = where(drop, null, label)."""
    B = labels.shape[0]
    V, H = table.shape
    out_dtype = table.dtype

    # Fold CFG token-drop + clamp ONCE here (single narrow int array into the
    # kernel, no in-kernel select).  Clamp diverges from PyTorch (which would
    # raise on an invalid index) but keeps DMA addressing in-bounds.
    eff = jnp.where(drop_ids.astype(jnp.int32) > 0,
                    jnp.int32(null_index), labels.astype(jnp.int32))
    eff = jnp.clip(eff, 0, V - 1)

    # Lane-dense hidden dim (unmasked full-lane output stores).
    H_pad = _round_up(max(H, 128), 128)
    table = jnp.pad(table, ((0, 0), (0, H_pad - H)))

    # Batch tile: up to 256 rows (v6e/v7x MXU is 256 wide), 16-row rounding so
    # bf16 vregs are sublane-full.
    TB = min(256, _round_up(B, 16))
    B_pad = _round_up(B, TB)
    eff = jnp.pad(eff, (0, B_pad - B))
    grid = (B_pad // TB,)

    fuse = add_to is not None
    if fuse:
        add = jnp.asarray(add_to)
        assert add.shape == (B, H), "add_to must be (B, H)"
        add = jnp.pad(add, ((0, B_pad - B), (0, H_pad - H)))

    item = jnp.dtype(table.dtype).itemsize
    vmem_cap = _vmem_capacity_bytes()
    resident_budget = int(0.75 * vmem_cap)      # never target full physical VMEM

    table_bytes = V * H_pad * item               # single-buffered (Buffered(1))
    out_bytes = 2 * TB * H_pad * item            # double-buffered output tiles
    add_bytes = 2 * TB * H_pad * item if fuse else 0
    lbl_bytes = 2 * TB * 128 * 4                 # (TB,1) int32 padded to a lane
    vmem_need = table_bytes + out_bytes + add_bytes + lbl_bytes + (2 << 20)

    # Path selection: DMA row-gather when the resident-table one-hot matmul
    # would be HBM-traffic / FLOP-wasteful (V >> batch) or doesn't fit VMEM.
    use_dma_gather = (V > 4 * B_pad) or (vmem_need > resident_budget)

    if not use_dma_gather:
        eff_2d = eff.reshape(B_pad, 1)
        in_specs = [
            pl.BlockSpec((TB, 1), lambda i: (i, 0)),
            # Constant index_map -> single-buffer the resident table.
            pl.BlockSpec((V, H_pad), lambda i: (0, 0),
                         pipeline_mode=pl.Buffered(1)),
        ]
        args = [eff_2d, table]
        if fuse:
            in_specs.append(pl.BlockSpec((TB, H_pad), lambda i: (i, 0)))
            args.append(add)

        cp_kwargs = dict(dimension_semantics=("parallel",))
        # Generation-aware threshold: v5e scoped default is 16 MiB, so raise
        # the limit above ~12 MiB of need; cap at 75% of physical VMEM.
        if vmem_need > (12 << 20):
            cp_kwargs["vmem_limit_bytes"] = int(min(vmem_need + (4 << 20),
                                                    resident_budget))

        out = pl.pallas_call(
            functools.partial(_onehot_gather_kernel, num_rows=V, fuse=fuse),
            out_shape=jax.ShapeDtypeStruct((B_pad, H_pad), out_dtype),
            grid_spec=pltpu.PrefetchScalarGridSpec(
                num_scalar_prefetch=0,
                grid=grid,
                in_specs=in_specs,
                out_specs=pl.BlockSpec((TB, H_pad), lambda i: (i, 0)),
            ),
            compiler_params=pltpu.CompilerParams(**cp_kwargs),
        )(*args)
    else:
        in_specs = []
        args = [eff]                              # scalar-prefetch -> SMEM
        if fuse:
            in_specs.append(pl.BlockSpec((TB, H_pad), lambda i, e: (i, 0)))
            args.append(add)
        in_specs.append(pl.BlockSpec(memory_space=pl.ANY))   # table stays in HBM
        args.append(table)

        out = pl.pallas_call(
            functools.partial(_dma_gather_kernel, tb=TB, fuse=fuse),
            out_shape=jax.ShapeDtypeStruct((B_pad, H_pad), out_dtype),
            grid_spec=pltpu.PrefetchScalarGridSpec(
                num_scalar_prefetch=1,
                grid=grid,
                in_specs=in_specs,
                out_specs=pl.BlockSpec((TB, H_pad), lambda i, e: (i, 0)),
                scratch_shapes=[pltpu.VMEM((TB, H_pad), out_dtype),
                                pltpu.SemaphoreType.DMA((1,))],
            ),
            compiler_params=pltpu.CompilerParams(
                dimension_semantics=("arbitrary",)),
        )(*args)

    if B_pad != B or H_pad != H:
        out = out[:B, :H]
    return out


class LabelEmbedder:
    """DiT class-label embedder with classifier-free-guidance dropout."""

    def __init__(self, num_classes, hidden_size, dropout_prob, key,
                 dtype=jnp.bfloat16):
        use_cfg_embedding = int(dropout_prob > 0)
        tab = jax.random.normal(
            key, (num_classes + use_cfg_embedding, hidden_size),
            jnp.float32) * 0.02
        self.embedding_table = tab.astype(dtype)   # bf16: halve HBM/VMEM bytes
        self.num_classes = num_classes
        self.dropout_prob = dropout_prob

    def __call__(self, labels, train, force_drop_ids=None, key=None,
                 add_to=None):
        B = labels.shape[0]
        use_dropout = self.dropout_prob > 0
        if force_drop_ids is not None:
            drop = (force_drop_ids == 1).astype(jnp.int32)
        elif train and use_dropout:
            drop = (jax.random.uniform(key, (B,)) < self.dropout_prob
                    ).astype(jnp.int32)
        else:
            drop = jnp.zeros((B,), jnp.int32)
        return label_embed_pallas(labels.astype(jnp.int32), drop,
                                  self.embedding_table,
                                  null_index=self.num_classes,
                                  add_to=add_to)


if __name__ == "__main__":
    root = jax.random.PRNGKey(0)
    k_table, k_labels, k_drop, k_t, k_big = jax.random.split(root, 5)

    num_classes, hidden_size, batch = 10, 128, 8
    embedder = LabelEmbedder(num_classes, hidden_size, 0.1, k_table)
    labels = jax.random.randint(k_labels, (batch,), 0, num_classes,
                                dtype=jnp.int32)

    # --- small-V path (resident table, one-hot MXU gather) -----------------
    emb_eval = jax.block_until_ready(embedder(labels, train=False))
    ref = embedder.embedding_table[labels]
    assert emb_eval.shape == (batch, hidden_size)
    assert jnp.allclose(emb_eval.astype(jnp.float32), ref.astype(jnp.float32)), \
        "one-hot gather mismatch"

    # training path with CFG dropout
    emb_train = jax.block_until_ready(embedder(labels, train=True, key=k_drop))
    assert emb_train.shape == (batch, hidden_size)

    # forced-drop path (CFG null-class row)
    force = jnp.array([1, 0, 1, 0, 1, 0, 1, 0], jnp.int32)
    emb_forced = jax.block_until_ready(
        embedder(labels, train=False, force_drop_ids=force))
    ref_forced = embedder.embedding_table[
        jnp.where(force == 1, num_classes, labels)]
    assert jnp.allclose(emb_forced.astype(jnp.float32),
                        ref_forced.astype(jnp.float32)), "forced-drop mismatch"

    # fused consumer add (c = t_emb + y_emb) — no standalone (B,H) round trip
    t_emb = (jax.random.normal(k_t, (batch, hidden_size), jnp.float32)
             * 0.1).astype(jnp.bfloat16)
    emb_fused = jax.block_until_ready(
        embedder(labels, train=False, add_to=t_emb))
    ref_fused = (ref.astype(jnp.float32)
                 + t_emb.astype(jnp.float32)).astype(jnp.bfloat16)
    assert jnp.allclose(emb_fused.astype(jnp.float32),
                        ref_fused.astype(jnp.float32), atol=1e-2, rtol=1e-2), \
        "fused-add mismatch"

    # --- large-V path (V >> B -> SMEM scalar-prefetch + HBM row-DMA gather) -
    big_classes = 1000                      # ImageNet-style: 1001 rows w/ CFG
    big_embedder = LabelEmbedder(big_classes, hidden_size, 0.1, k_big)
    big_labels = jax.random.randint(k_labels, (batch,), 0, big_classes,
                                    dtype=jnp.int32)
    big_eval = jax.block_until_ready(big_embedder(big_labels, train=False))
    big_ref = big_embedder.embedding_table[big_labels]
    assert jnp.allclose(big_eval.astype(jnp.float32),
                        big_ref.astype(jnp.float32)), "DMA gather mismatch"

    big_fused = jax.block_until_ready(
        big_embedder(big_labels, train=False, add_to=t_emb))
    big_ref_fused = (big_ref.astype(jnp.float32)
                     + t_emb.astype(jnp.float32)).astype(jnp.bfloat16)
    assert jnp.allclose(big_fused.astype(jnp.float32),
                        big_ref_fused.astype(jnp.float32),
                        atol=1e-2, rtol=1e-2), "DMA fused-add mismatch"

    # --- non-multiple-of-128 hidden dim handled via internal lane padding ---
    embedder_small = LabelEmbedder(num_classes, 32, 0.1, k_table)
    emb_small = jax.block_until_ready(embedder_small(labels, train=False))
    ref_small = embedder_small.embedding_table[labels]
    assert emb_small.shape == (batch, 32)
    assert jnp.allclose(emb_small.astype(jnp.float32),
                        ref_small.astype(jnp.float32)), "padded-H mismatch"

    print("KERNEL_OK")
</pallas_src>

<mosaic_0001>
module attributes {stable_mosaic.version = 11 : i64} {
  func.func @_onehot_gather_kernel(%arg0: i32, %arg1: memref<16x1xi32, #tpu.memory_space<vmem>>, %arg2: memref<11x128xbf16, #tpu.memory_space<vmem>>, %arg3: memref<16x128xbf16, #tpu.memory_space<vmem>>) attributes {dimension_semantics = [#tpu.dimension_semantics<parallel>], iteration_bounds = array<i64: 1>, scalar_prefetch = 0 : i64, scratch_operands = 0 : i64, tpu.core_type = #tpu.core_type<tc>, window_params = [{transform_indices = @transform_0, window_bounds = array<i64: 16, 1>}, {pipeline_mode = #tpu.pipeline_mode<synchronous>, transform_indices = @transform_1, window_bounds = array<i64: 11, 128>}, {transform_indices = @transform_2, window_bounds = array<i64: 16, 128>}]} {
    %c0 = arith.constant 0 : index
    %c0_0 = arith.constant 0 : index
    %0 = vector.load %arg1[%c0, %c0_0] : memref<16x1xi32, #tpu.memory_space<vmem>>, vector<16x1xi32>
    %1 = tpu.iota {dimensions = array<i32: 1>} : vector<16x11xi32>
    %2 = vector.broadcast %0 : vector<16x1xi32> to vector<16x11xi32>
    %3 = arith.cmpi eq, %1, %2 : vector<16x11xi32>
    %4 = arith.extui %3 : vector<16x11xi1> to vector<16x11xi32>
    %5 = arith.sitofp %4 : vector<16x11xi32> to vector<16x11xf32>
    %6 = arith.truncf %5 : vector<16x11xf32> to vector<16x11xbf16>
    %c0_1 = arith.constant 0 : index
    %c0_2 = arith.constant 0 : index
    %7 = vector.load %arg2[%c0_1, %c0_2] : memref<11x128xbf16, #tpu.memory_space<vmem>>, vector<11x128xbf16>
    %cst = arith.constant dense<0.000000e+00> : vector<16x128xf32>
    %8 = tpu.matmul %6, %7, %cst {dimension_numbers = #tpu.dot_dimension_numbers<[1], [0], [0], [1], [0, 0, 1, 1], [], []>} : vector<16x11xbf16>, vector<11x128xbf16>, vector<16x128xf32> -> vector<16x128xf32>
    %9 = arith.truncf %8 : vector<16x128xf32> to vector<16x128xbf16>
    %c0_3 = arith.constant 0 : index
    %c0_4 = arith.constant 0 : index
    %10 = vector.load %arg3[%c0_3, %c0_4] : memref<16x128xbf16, #tpu.memory_space<vmem>>, vector<16x128xbf16>
    tpu.vector_store %arg3[%c0_3, %c0_4], %9 {strides = array<i32>} : memref<16x128xbf16, #tpu.memory_space<vmem>>, vector<16x128xbf16>,
    return
  }
  func.func @transform_0(%arg0: i32) -> (i32, i32) {
    %c0_i32 = arith.constant 0 : i32
    %c0_i32_0 = arith.constant 0 : i32
    return %arg0, %c0_i32 : i32, i32
  }
  func.func @transform_1(%arg0: i32) -> (i32, i32) {
    %c0_i32 = arith.constant 0 : i32
    %c0_i32_0 = arith.constant 0 : i32
    %c0_i32_1 = arith.constant 0 : i32
    return %c0_i32, %c0_i32_0 : i32, i32
  }
  func.func @transform_2(%arg0: i32) -> (i32, i32) {
    %c0_i32 = arith.constant 0 : i32
    %c0_i32_0 = arith.constant 0 : i32
    return %arg0, %c0_i32 : i32, i32
  }
}

</mosaic_0001>

<llo_original>
// kernel: tpu_custom_call.1
$region0: #{tpu_custom_call.1}
  #allocation0 [shape = 'u32[]', space=smem, size = 0x4, offset = 0x4, fixed_abs, tag = 'smem constant byte address 0x4 - core index']
  #allocation1 [shape = 'u32[144,128]{1,0:T(1,128)}', space=vmem, size = 0x12000, scoped, tag = 'internal scratch']
  %s0 = inlined_call_operand.vmem [shape: s32[16,1], index: 0, kind: input, shape index: {}]
  %s1 = inlined_call_operand.vmem [shape: bf16[11,128], index: 1, kind: input, shape index: {}]
  %s2 = inlined_call_operand.hbm [shape: bf16[16,128], index: 2, kind: output, shape index: {}]
  %s3 = sld [smem:[#allocation0]]
  $region18: #{tpu_custom_call.1} parent=0
    _
  %s5 = ssub.s32 1, %s3
  %s6 = scalar_select 0, %s5, %s3
  $region1: #{tpu_custom_call.1} parent=0
    #allocation2 [shape = 'u8[4096]{0}', space=vmem, size = 0x1000, scoped, tag = 'output window, operand 0, single buffered']
    #allocation3 [shape = 's32[1]{0}', space=sflag, size = 0x4, scoped, tag = 'scoped memory for tpu_custom_call.1']
    %7 = vsyncpa [#allocation3], 0
    // Predicated region
    $region2: #{tpu_custom_call.1} parent=1 // pred_check
      _
    $region3: #{tpu_custom_call.1} parent=1 // pred_check_branch
      %9 = sbr.rel (0) target = $region5
    $region4: #{tpu_custom_call.1} parent=1 // pred_region
      _
    $region5: #{tpu_custom_call.1} parent=1 // pred_fallthru
      _
    // Predicated region
    $region6: #{tpu_custom_call.1} parent=1 // pred_check
      _
    $region7: #{tpu_custom_call.1} parent=1 // pred_check_branch
      %11 = sbr.rel (0) target = $region9
    $region8: #{tpu_custom_call.1} parent=1 // pred_region
      _
    $region9: #{tpu_custom_call.1} parent=1 // pred_fallthru
      _
    %v13 = vld [vmem:[%s0] sm:$0xff]
    %v14 = vld [vmem:[%s0 + $0x8] sm:$0xff]
    %v15 = vlaneseq
    %v16 = vand.u32 %v15, 127
    %17 = vset.pattern.permute.xlu0 0
    %18 = vperm.xlu0 %17, %v13
    %v19 = vpop.permute.xlu0 %18
    %20 = vset.pattern.permute.xlu0 0
    %21 = vperm.xlu0 %20, %v14
    %v22 = vpop.permute.xlu0 %21
    %vm23 = vcmp.eq.s32.totalorder %v16, %v19
    %vm24 = vcmp.eq.s32.totalorder %v16, %v22
    %v25 = vsel %vm23, 1, 0
    %v26 = vsel %vm24, 1, 0
    %v27 = vcvt.s32.f32 %v25
    %v28 = vcvt.s32.f32 %v26
    %v29 = vpack.c.bf16 %v28, %v27
    %v30 = vld [vmem:[%s1] sm:$0xf]
    %v31 = vld [vmem:[%s1 + $0x4] sm:$0x3]
    %v34 = vunpack.c.l.b16 %v30
    %v35 = vunpack.c.l.b16 %v31
    %v36 = vpack.c.b16 %v35, %v34
    %vm37 = vcmask 89088
    %v39 = vsel %vm37, %v29, 0
    %vm41 = vcmask 1044480
    %vm42 = vcmask 1045504
    %v43 = vsel %vm41, 4294967295, 65535
    %v44 = vsel %vm42, %v43, 0
    %v46 = vand.u32 %v36, %v44
    %48 = vmatprep.subr.bf16.mxu0 0
    %49 = vmatpush1.bf16.msra.mxu0 0
    %50 = vmatprep.subr.bf16.mxu0 0
    %51 = vmatpush1.bf16.msra.mxu0 0
    %52 = vmatprep.subr.bf16.mxu0 0
    %53 = vmatpush1.bf16.msra.mxu0 0
    %54 = vmatprep.subr.bf16.mxu0 0
    %55 = vmatpush1.bf16.msra.mxu0 0
    %56 = vmatprep.subr.bf16.mxu0 0
    %57 = vmatpush1.bf16.msra.mxu0 0
    %58 = vmatprep.subr.bf16.mxu0 0
    %59 = vmatpush1.bf16.msra.mxu0 0
    %60 = vmatprep.subr.bf16.mxu0 0
    %61 = vmatpush1.bf16.msra.mxu0 0
    %62 = vmatprep.subr.bf16.mxu0 0
    %63 = vmatpush1.bf16.msra.mxu0 %v46
    %64 = vmatprep.subr.bf16.mxu0 0
    %65 = vmatpush2.bf16.msra.mxu0 0
    %66 = vmatprep.subr.bf16.mxu0 0
    %67 = vmatpush2.bf16.msra.mxu0 0
    %68 = vmatprep.subr.bf16.mxu0 0
    %69 = vmatpush2.bf16.msra.mxu0 0
    %70 = vmatprep.subr.bf16.mxu0 0
    %71 = vmatpush2.bf16.msra.mxu0 0
    %72 = vmatprep.subr.bf16.mxu0 0
    %73 = vmatpush2.bf16.msra.mxu0 0
    %74 = vmatprep.subr.bf16.mxu0 0
    %75 = vmatpush2.bf16.msra.mxu0 0
    %76 = vmatprep.subr.bf16.mxu0 0
    %77 = vmatpush2.bf16.msra.mxu0 0
    %78 = vmatprep.subr.bf16.mxu0 0
    %79 = vmatpush2.bf16.msra.mxu0 0
    %80 = vmatprep.mubr.bf16.mxu0 0
    %81 = vmatmul.mubr.bf16.gmra.mxu0 %v39
    %v82 = vpop.f32.mrf.mxu0
    %v83 = vadd.f32 0.0, %v82
    %v84 = vpop.f32.mrf.mxu0
    %v85 = vpop.f32.mrf.mxu0
    %v86 = vadd.f32 0.0, %v85
    %v87 = vpop.f32.mrf.mxu0
    %88 = vdwg.mxu0
    %v89 = vpack.c.bf16 %v86, %v83
    %v91 = vunpack.c.l.b16 %v89
    %v92 = vunpack.c.h.b16 %v89
    %v93 = vpack.c.b16 %v91, %v91
    %v94 = vpack.c.b16 %v92, %v92
    %97 = vst [vmem:[#allocation2] sm:$0xf] %v93
    %98 = vst [vmem:[#allocation2 + $0x4] sm:$0xf] %v94
    // Predicated region
    $region10: #{tpu_custom_call.1} parent=1 // pred_check
      _
    $region11: #{tpu_custom_call.1} parent=1 // pred_check_branch
      %100 = sbr.rel (0) target = $region13
    $region12: #{tpu_custom_call.1} parent=1 // pred_region
      %s102 = ssub.s32 128, 128
      %103 = vsyncadd [#allocation3], %s102
      %s104 = sshll.u32 [#allocation2], 4
      %s105 = int_to_ptr.vmem [resolvable:$true] %s104
      %110 = dma.vmem_to_hbm [thread:$0]  %s105, 128, %s2, [#allocation3], 64, 64, 4
    $region13: #{tpu_custom_call.1} parent=1 // pred_fallthru
      _
    // Predicated region
    $region14: #{tpu_custom_call.1} parent=1 // pred_check
      _
    $region15: #{tpu_custom_call.1} parent=1 // pred_check_branch
      %112 = sbr.rel (0) target = $region17
    $region16: #{tpu_custom_call.1} parent=1 // pred_region
      %113 = dma.done [#allocation3], 128
    $region17: #{tpu_custom_call.1} parent=1 // pred_fallthru
      _
    %114 = vsyncpa [#allocation3], 1

</llo_original>
